<compile_context>
chip_gen: v6e
topology: v6e:2x2x1
jax: 0.10.0
libtpu: 0.0.40
codegen_flags: <defaults>
</compile_context>

<pallas_src>
import jax
import jax.numpy as jnp
from jax.experimental import pallas as pl
from jax.experimental.pallas import tpu as pltpu


def _round_up(x, m):
    return ((x + m - 1) // m) * m


def _cdiv(a, b):
    return -(-a // b)


def _sublane(dtype):
    # sublane multiple for the second-minor dim: 8 for f32, 16 for bf16, ...
    return max(8, 32 // jnp.dtype(dtype).itemsize)


def _vmem_limit_bytes():
    # Generation-aware VMEM cap with headroom for compiler-internal scratch:
    # v7x (64 MiB/TC) -> ~44 MiB; v5e/v6e (128 MiB) -> ~108 MiB.
    try:
        cap = int(pltpu.get_tpu_info().vmem_capacity_bytes)
    except Exception:
        cap = 64 * 2 ** 20  # conservative default (v7x per-TC VMEM)
    return max(32 * 2 ** 20, cap - 20 * 2 ** 20)


def _shuffle_head_kernel(x_ref, w_ref, b_ref, o_ref):
    # x_ref: (TN, C, HW)  NCHW activations, spatial flattened onto the lane axis
    # w_ref: (C, NCP)     FC weight (transposed, 1/HW pre-folded, class-padded, bf16)
    # b_ref: (1, NCP)     bias (class-padded, f32)
    # o_ref: (TN, NCP)    logits tile
    #
    # Global average pool == lane-axis reduce with f32 accumulation (the 1/HW
    # scale lives in the weight).  If a bf16 input ever shows a materialized
    # f32 tile copy in the MLIR, switch to chunked fori_loop accumulation.
    pooled = jnp.sum(x_ref[...], axis=2, dtype=jnp.float32)              # (TN, C)
    # Dropout is nn.Identity() in this configuration (dropout=False) -> no-op.
    out = jnp.dot(pooled.astype(w_ref.dtype), w_ref[...],
                  preferred_element_type=jnp.float32)                    # (TN, NCP)
    o_ref[...] = (out + b_ref[...]).astype(o_ref.dtype)


def prepare_shuffle_head_params(weight, bias, hw, *, weight_dtype=jnp.bfloat16):
    """One-time FC-param prep (hoisted out of the per-call path).

    weight: (nc, C) PyTorch Linear layout; bias: (nc,).
    Returns (w_t, b_p): (C, NCP) weight with the 1/HW pool scale folded in and
    the class dim zero-padded to a lane-dense multiple of 128, plus the padded
    f32 bias (1, NCP).
    """
    nc, c = weight.shape
    ncp = _round_up(max(nc, 128), 128)
    w_scaled = (weight.astype(jnp.float32).T * (1.0 / hw)).astype(weight_dtype)
    w_t = jnp.zeros((c, ncp), weight_dtype).at[:, :nc].set(w_scaled)
    b_p = jnp.zeros((1, ncp), jnp.float32).at[0, :nc].set(bias.astype(jnp.float32))
    return w_t, b_p


def shuffle_head(x, weight, bias, *, weight_dtype=jnp.bfloat16, min_grid_steps=4):
    """ShuffleHead forward: global average pool -> (identity dropout) -> Linear.

    x: (N, C, H, W) NCHW; weight: (nc, C) (PyTorch layout); bias: (nc,).
    """
    # TODO(synk): the optional dropout=True branch (nn.Dropout(0.2), training
    # mode) is not implemented; the default configuration uses nn.Identity.
    n, c, h, w = x.shape
    hw = h * w
    nc = weight.shape[0]

    w_t, b_p = prepare_shuffle_head_params(weight, bias, hw, weight_dtype=weight_dtype)
    ncp = w_t.shape[1]

    x3 = x.reshape(n, c, hw)  # free reshape (contiguous NCHW), no HBM round-trip

    in_dt = jnp.dtype(x.dtype)
    out_dt = in_dt
    in_sub = _sublane(in_dt)
    out_sub = _sublane(out_dt)

    vmem_limit = _vmem_limit_bytes()

    # VMEM accounting (layout-padded, conservative):
    #   input block  (tn, C, HW): C->sublane pad, HW->128 lane pad, x2 buffers
    #   output block (tn, NCP):                                      x2 buffers
    #   weight/bias: constant index maps but counted at 2x to be safe
    in_row = _round_up(c, in_sub) * _round_up(hw, 128) * in_dt.itemsize
    out_row = ncp * out_dt.itemsize
    fixed = (2 * _round_up(c, 16) * ncp * jnp.dtype(weight_dtype).itemsize
             + 2 * 8 * ncp * 4
             + 2 * 2 ** 20)  # margin for compiler-internal scratch
    per_row = 2 * in_row + 2 * out_row
    tn_budget = max(1, (vmem_limit - fixed) // per_row)

    if n <= out_sub:
        tn = n  # full-dim block (always legal, grid collapses at tiny batches)
    else:
        # Keep >= min_grid_steps grid steps so DMA/compute overlap exists and
        # v7x's two TensorCores both get batch tiles; stay sublane-aligned for
        # dense (unmasked) output stores.
        tn_target = _round_up(_cdiv(n, min_grid_steps), out_sub)
        tn = max(out_sub, min((tn_budget // out_sub) * out_sub, tn_target))
        if tn >= n:
            tn = n

    grid = (_cdiv(n, tn),)

    cost = pl.CostEstimate(
        flops=2 * n * c * ncp + n * c * hw,
        transcendentals=0,
        bytes_accessed=(n * c * hw) * in_dt.itemsize
                       + c * ncp * jnp.dtype(weight_dtype).itemsize + ncp * 4
                       + n * ncp * out_dt.itemsize,
    )

    out_padded = pl.pallas_call(
        _shuffle_head_kernel,
        out_shape=jax.ShapeDtypeStruct((n, ncp), out_dt),
        grid_spec=pltpu.PrefetchScalarGridSpec(
            num_scalar_prefetch=0,
            grid=grid,
            in_specs=[
                pl.BlockSpec((tn, c, hw), lambda i: (i, 0, 0)),
                # Constant index maps -> weight/bias stay resident in VMEM
                # (counted at 2x in the budget above in case Mosaic
                # double-buffers them anyway).
                pl.BlockSpec((c, ncp), lambda i: (0, 0)),
                pl.BlockSpec((1, ncp), lambda i: (0, 0)),
            ],
            out_specs=pl.BlockSpec((tn, ncp), lambda i: (i, 0)),
        ),
        compiler_params=pltpu.CompilerParams(
            dimension_semantics=("parallel",),   # megacore-shard batch tiles
            vmem_limit_bytes=int(vmem_limit),
        ),
        cost_estimate=cost,
    )(x3, w_t, b_p)

    return out_padded[:, :nc]


def _reference(x, weight, bias):
    pooled = jnp.mean(x.astype(jnp.float32), axis=(2, 3))               # (N, C)
    return pooled @ weight.astype(jnp.float32).T + bias.astype(jnp.float32)


if __name__ == "__main__":
    key = jax.random.PRNGKey(0)
    k_x, k_w, k_b = jax.random.split(key, 3)

    N, C, H, W = 2, 32, 8, 8      # w_in = C = 32
    NC = 16                       # number of classes

    x = jax.random.normal(k_x, (N, C, H, W), dtype=jnp.float32)
    # Deterministic "Linear" params (PyTorch-style uniform bound 1/sqrt(w_in)).
    bound = 1.0 / (C ** 0.5)
    weight = jax.random.uniform(k_w, (NC, C), jnp.float32, -bound, bound)
    bias = jax.random.uniform(k_b, (NC,), jnp.float32, -bound, bound)

    out = shuffle_head(x, weight, bias)
    out = jax.block_until_ready(out)

    ref = _reference(x, weight, bias)
    assert out.shape == (N, NC)
    # bf16 FC weight path -> tolerance sized for bf16 rounding of the head.
    assert jnp.allclose(out, ref, atol=2e-2, rtol=2e-2), "mismatch vs reference"

    print("KERNEL_OK")
</pallas_src>

<mosaic_0001>
module attributes {stable_mosaic.version = 11 : i64} {
  func.func @_shuffle_head_kernel(%arg0: i32, %arg1: memref<2x32x64xf32, #tpu.memory_space<vmem>>, %arg2: memref<32x128xbf16, #tpu.memory_space<vmem>>, %arg3: memref<1x128xf32, #tpu.memory_space<vmem>>, %arg4: memref<2x128xf32, #tpu.memory_space<vmem>>) attributes {dimension_semantics = [#tpu.dimension_semantics<parallel>], iteration_bounds = array<i64: 1>, scalar_prefetch = 0 : i64, scratch_operands = 0 : i64, tpu.core_type = #tpu.core_type<tc>, window_params = [{transform_indices = @transform_0, window_bounds = array<i64: 2, 32, 64>}, {pipeline_mode = #tpu.pipeline_mode<synchronous>, transform_indices = @transform_1, window_bounds = array<i64: 32, 128>}, {pipeline_mode = #tpu.pipeline_mode<synchronous>, transform_indices = @transform_2, window_bounds = array<i64: 1, 128>}, {transform_indices = @transform_3, window_bounds = array<i64: 2, 128>}]} {
    %c0 = arith.constant 0 : index
    %c0_0 = arith.constant 0 : index
    %c0_1 = arith.constant 0 : index
    %0 = vector.load %arg1[%c0, %c0_0, %c0_1] : memref<2x32x64xf32, #tpu.memory_space<vmem>>, vector<2x32x64xf32>
    %cst = arith.constant dense<0.000000e+00> : vector<2x32xf32>
    %1 = vector.multi_reduction <add>, %0, %cst [2] : vector<2x32x64xf32> to vector<2x32xf32>
    %2 = arith.truncf %1 : vector<2x32xf32> to vector<2x32xbf16>
    %c0_2 = arith.constant 0 : index
    %c0_3 = arith.constant 0 : index
    %3 = vector.load %arg2[%c0_2, %c0_3] : memref<32x128xbf16, #tpu.memory_space<vmem>>, vector<32x128xbf16>
    %cst_4 = arith.constant dense<0.000000e+00> : vector<2x128xf32>
    %4 = tpu.matmul %2, %3, %cst_4 {dimension_numbers = #tpu.dot_dimension_numbers<[1], [0], [0], [1], [0, 0, 1, 1], [], []>} : vector<2x32xbf16>, vector<32x128xbf16>, vector<2x128xf32> -> vector<2x128xf32>
    %c0_5 = arith.constant 0 : index
    %c0_6 = arith.constant 0 : index
    %5 = vector.load %arg3[%c0_5, %c0_6] : memref<1x128xf32, #tpu.memory_space<vmem>>, vector<1x128xf32>
    %6 = vector.broadcast %5 : vector<1x128xf32> to vector<2x128xf32>
    %7 = arith.addf %4, %6 : vector<2x128xf32>
    %c0_7 = arith.constant 0 : index
    %c0_8 = arith.constant 0 : index
    %8 = vector.load %arg4[%c0_7, %c0_8] : memref<2x128xf32, #tpu.memory_space<vmem>>, vector<2x128xf32>
    tpu.vector_store %arg4[%c0_7, %c0_8], %7 {strides = array<i32>} : memref<2x128xf32, #tpu.memory_space<vmem>>, vector<2x128xf32>,
    return
  }
  func.func @transform_0(%arg0: i32) -> (i32, i32, i32) {
    %c0_i32 = arith.constant 0 : i32
    %c0_i32_0 = arith.constant 0 : i32
    %c0_i32_1 = arith.constant 0 : i32
    return %arg0, %c0_i32, %c0_i32_0 : i32, i32, i32
  }
  func.func @transform_1(%arg0: i32) -> (i32, i32) {
    %c0_i32 = arith.constant 0 : i32
    %c0_i32_0 = arith.constant 0 : i32
    %c0_i32_1 = arith.constant 0 : i32
    return %c0_i32, %c0_i32_0 : i32, i32
  }
  func.func @transform_2(%arg0: i32) -> (i32, i32) {
    %c0_i32 = arith.constant 0 : i32
    %c0_i32_0 = arith.constant 0 : i32
    %c0_i32_1 = arith.constant 0 : i32
    return %c0_i32, %c0_i32_0 : i32, i32
  }
  func.func @transform_3(%arg0: i32) -> (i32, i32) {
    %c0_i32 = arith.constant 0 : i32
    %c0_i32_0 = arith.constant 0 : i32
    return %arg0, %c0_i32 : i32, i32
  }
}

</mosaic_0001>

<llo_original>
// kernel: tpu_custom_call.1
$region0: #{tpu_custom_call.1}
  #allocation0 [shape = 'u32[]', space=smem, size = 0x4, offset = 0x4, fixed_abs, tag = 'smem constant byte address 0x4 - core index']
  #allocation1 [shape = 'u32[144,128]{1,0:T(1,128)}', space=vmem, size = 0x12000, scoped, tag = 'internal scratch']
  %s0 = inlined_call_operand.hbm [shape: f32[2,32,64], index: 0, kind: input, shape index: {}]
  %s1 = inlined_call_operand.hbm [shape: bf16[32,128], index: 1, kind: input, shape index: {}]
  %s2 = inlined_call_operand.vmem [shape: f32[1,128], index: 2, kind: input, shape index: {}]
  %s3 = inlined_call_operand.hbm [shape: f32[2,128], index: 3, kind: output, shape index: {}]
  %s4 = sld [smem:[#allocation0]]
  $region30: #{tpu_custom_call.1} parent=0
    _
  %s6 = ssub.s32 1, %s4
  %s7 = scalar_select 0, %s6, %s4
  $region1: #{tpu_custom_call.1} parent=0
    #allocation2 [shape = 'u8[32768]{0}', space=vmem, size = 0x8000, scoped, tag = 'input window, operand 0, single buffered']
    #allocation3 [shape = 's32[1]{0}', space=sflag, size = 0x4, scoped, tag = 'scoped memory for tpu_custom_call.1']
    #allocation4 [shape = 's32[1]{0}', space=sflag, size = 0x4, scoped, tag = 'scoped memory for tpu_custom_call.1']
    #allocation5 [shape = 'u8[8192]{0}', space=vmem, size = 0x2000, scoped, tag = 'input window, operand 1, single buffered']
    #allocation6 [shape = 's32[1]{0}', space=sflag, size = 0x4, scoped, tag = 'scoped memory for tpu_custom_call.1']
    #allocation7 [shape = 'u8[1024]{0}', space=vmem, size = 0x400, scoped, tag = 'output window, operand 0, single buffered']
    %8 = vsyncpa [#allocation3], 0
    %9 = vsyncpa [#allocation6], 0
    %10 = vsyncpa [#allocation4], 0
    // Predicated region
    $region2: #{tpu_custom_call.1} parent=1 // pred_check
      _
    $region3: #{tpu_custom_call.1} parent=1 // pred_check_branch
      %12 = sbr.rel (0) target = $region5
    $region4: #{tpu_custom_call.1} parent=1 // pred_region
      %s14 = ssub.s32 1024, 1024
      %15 = vsyncadd [#allocation3], %s14
      %s16 = sshll.u32 [#allocation2], 4
      %s17 = int_to_ptr.vmem [resolvable:$true] %s16
      %22 = dma.hbm_to_vmem [thread:$0]  %s0, 1024, %s17, [#allocation3], 128, 128, 8
    $region5: #{tpu_custom_call.1} parent=1 // pred_fallthru
      _
    // Predicated region
    $region6: #{tpu_custom_call.1} parent=1 // pred_check
      _
    $region7: #{tpu_custom_call.1} parent=1 // pred_check_branch
      %24 = sbr.rel (0) target = $region9
    $region8: #{tpu_custom_call.1} parent=1 // pred_region
      %s26 = ssub.s32 256, 256
      %27 = vsyncadd [#allocation6], %s26
      %s28 = sshll.u32 [#allocation5], 4
      %s29 = int_to_ptr.vmem [resolvable:$true] %s28
      %34 = dma.hbm_to_vmem [thread:$0]  %s1, 256, %s29, [#allocation6], 64, 64, 4
    $region9: #{tpu_custom_call.1} parent=1 // pred_fallthru
      _
    // Predicated region
    $region10: #{tpu_custom_call.1} parent=1 // pred_check
      _
    $region11: #{tpu_custom_call.1} parent=1 // pred_check_branch
      %36 = sbr.rel (0) target = $region13
    $region12: #{tpu_custom_call.1} parent=1 // pred_region
      _
    $region13: #{tpu_custom_call.1} parent=1 // pred_fallthru
      _
    // Predicated region
    $region14: #{tpu_custom_call.1} parent=1 // pred_check
      _
    $region15: #{tpu_custom_call.1} parent=1 // pred_check_branch
      %38 = sbr.rel (0) target = $region17
    $region16: #{tpu_custom_call.1} parent=1 // pred_region
      %39 = dma.done [#allocation3], 1024
    $region17: #{tpu_custom_call.1} parent=1 // pred_fallthru
      _
    // Predicated region
    $region18: #{tpu_custom_call.1} parent=1 // pred_check
      _
    $region19: #{tpu_custom_call.1} parent=1 // pred_check_branch
      %41 = sbr.rel (0) target = $region21
    $region20: #{tpu_custom_call.1} parent=1 // pred_region
      %42 = dma.done [#allocation6], 256
    $region21: #{tpu_custom_call.1} parent=1 // pred_fallthru
      _
    %v44 = vld [vmem:[#allocation2] sm:$0xff]
    %v45 = vld [vmem:[#allocation2 + $0x8] sm:$0xff]
    %v46 = vld [vmem:[#allocation2 + $0x10] sm:$0xff]
    %v47 = vld [vmem:[#allocation2 + $0x18] sm:$0xff]
    %v48 = vld [vmem:[#allocation2 + $0x20] sm:$0xff]
    %v49 = vld [vmem:[#allocation2 + $0x28] sm:$0xff]
    %v50 = vld [vmem:[#allocation2 + $0x30] sm:$0xff]
    %v51 = vld [vmem:[#allocation2 + $0x38] sm:$0xff]
    %vm52 = vcmask 523264
    %v53 = vsel %vm52, %v44, 0.0
    %54 = vadd.xlane.f32.xlu0 %v53
    %v55 = vpop.xlane.xlu0 %54
    %v56 = vsel %vm52, %v45, 0.0
    %57 = vadd.xlane.f32.xlu0 %v56
    %v58 = vpop.xlane.xlu0 %57
    %v59 = vsel %vm52, %v46, 0.0
    %60 = vadd.xlane.f32.xlu0 %v59
    %v61 = vpop.xlane.xlu0 %60
    %v62 = vsel %vm52, %v47, 0.0
    %63 = vadd.xlane.f32.xlu0 %v62
    %v64 = vpop.xlane.xlu0 %63
    %v65 = vsel %vm52, %v48, 0.0
    %66 = vadd.xlane.f32.xlu0 %v65
    %v67 = vpop.xlane.xlu0 %66
    %v68 = vsel %vm52, %v49, 0.0
    %69 = vadd.xlane.f32.xlu0 %v68
    %v70 = vpop.xlane.xlu0 %69
    %v71 = vsel %vm52, %v50, 0.0
    %72 = vadd.xlane.f32.xlu0 %v71
    %v73 = vpop.xlane.xlu0 %72
    %v74 = vsel %vm52, %v51, 0.0
    %75 = vadd.xlane.f32.xlu0 %v74
    %v76 = vpop.xlane.xlu0 %75
    %v77 = vpack.c.bf16 %v58, %v55
    %v78 = vpack.c.bf16 %v64, %v61
    %v79 = vpack.c.bf16 %v70, %v67
    %v80 = vpack.c.bf16 %v76, %v73
    %v81 = vld [vmem:[#allocation5] sm:$0xf]
    %v82 = vld [vmem:[#allocation5 + $0x4] sm:$0xf]
    %v83 = vld [vmem:[#allocation5 + $0x8] sm:$0xf]
    %v84 = vld [vmem:[#allocation5 + $0xc] sm:$0xf]
    %v85 = vld [vmem:[%s2] sm:$0x1]
    %v87 = vlaneseq
    %v88 = vshrl.u32 %v87, 7
    %v89 = vsub.s32 0, %v88
    %v90 = vrot.slane %v85, %v89
    %v96 = vunpack.c.l.b16 %v77
    %v97 = vunpack.c.h.b16 %v77
    %v98 = vunpack.c.l.b16 %v78
    %v99 = vunpack.c.h.b16 %v78
    %v100 = vunpack.c.l.b16 %v79
    %v101 = vunpack.c.h.b16 %v79
    %v102 = vunpack.c.l.b16 %v80
    %v103 = vunpack.c.h.b16 %v80
    %v104 = vlaneseq
    %v105 = vand.u32 %v104, 127
    %v106 = vlaneseq
    %v107 = vshrl.u32 %v106, 7
    %v108 = vsub.s32 %v105, %v107
    %v109 = vrot.slane %v96, %v108
    %v110 = vadd.s32 %v105, 4294967288
    %v111 = vlaneseq
    %v112 = vshrl.u32 %v111, 7
    %v113 = vsub.s32 %v110, %v112
    %v114 = vrot.slane %v97, %v113
    %vm115 = vcmask 130112
    %v116 = vsel %vm115, %v114, %v109
    %v117 = vadd.s32 %v105, 4294967280
    %v118 = vlaneseq
    %v119 = vshrl.u32 %v118, 7
    %v120 = vsub.s32 %v117, %v119
    %v121 = vrot.slane %v98, %v120
    %vm122 = vcmask 195712
    %v123 = vsel %vm122, %v121, %v116
    %v124 = vadd.s32 %v105, 4294967272
    %v125 = vlaneseq
    %v126 = vshrl.u32 %v125, 7
    %v127 = vsub.s32 %v124, %v126
    %v128 = vrot.slane %v99, %v127
    %vm129 = vcmask 261312
    %v130 = vsel %vm129, %v128, %v123
    %v131 = vlaneseq
    %v132 = vshrl.u32 %v131, 7
    %v133 = vsub.s32 %v105, %v132
    %v134 = vrot.slane %v100, %v133
    %v135 = vlaneseq
    %v136 = vshrl.u32 %v135, 7
    %v137 = vsub.s32 %v110, %v136
    %v138 = vrot.slane %v101, %v137
    %v139 = vsel %vm115, %v138, %v134
    %v140 = vlaneseq
    %v141 = vshrl.u32 %v140, 7
    %v142 = vsub.s32 %v117, %v141
    %v143 = vrot.slane %v102, %v142
    %v144 = vsel %vm122, %v143, %v139
    %v145 = vlaneseq
    %v146 = vshrl.u32 %v145, 7
    %v147 = vsub.s32 %v124, %v146
    %v148 = vrot.slane %v103, %v147
    %v149 = vsel %vm129, %v148, %v144
    %vm150 = vcmask 1041409
    %v151 = vsel %vm150, %v149, %v130
    %v152 = vpack.c.b16 %v151, %v151
    %v157 = vunpack.c.l.b16 %v81
    %v158 = vunpack.c.l.b16 %v82
    %v159 = vunpack.c.l.b16 %v83
    %v160 = vunpack.c.l.b16 %v84
    %v161 = vpack.c.b16 %v158, %v157
    %v162 = vpack.c.b16 %v160, %v159
    %vm165 = vcmask 261120
    %v167 = vsel %vm165, %v152, 0
    %169 = vmatprep.subr.bf16.mxu0 0
    %170 = vmatpush1.bf16.msra.mxu0 0
    %171 = vmatprep.subr.bf16.mxu0 0
    %172 = vmatpush1.bf16.msra.mxu0 0
    %173 = vmatprep.subr.bf16.mxu0 0
    %174 = vmatpush1.bf16.msra.mxu0 0
    %175 = vmatprep.subr.bf16.mxu0 0
    %176 = vmatpush1.bf16.msra.mxu0 0
    %177 = vmatprep.subr.bf16.mxu0 0
    %178 = vmatpush1.bf16.msra.mxu0 0
    %179 = vmatprep.subr.bf16.mxu0 0
    %180 = vmatpush1.bf16.msra.mxu0 0
    %181 = vmatprep.subr.bf16.mxu0 0
    %182 = vmatpush1.bf16.msra.mxu0 %v162
    %183 = vmatprep.subr.bf16.mxu0 0
    %184 = vmatpush1.bf16.msra.mxu0 %v161
    %185 = vmatprep.subr.bf16.mxu0 0
    %186 = vmatpush2.bf16.msra.mxu0 0
    %187 = vmatprep.subr.bf16.mxu0 0
    %188 = vmatpush2.bf16.msra.mxu0 0
    %189 = vmatprep.subr.bf16.mxu0 0
    %190 = vmatpush2.bf16.msra.mxu0 0
    %191 = vmatprep.subr.bf16.mxu0 0
    %192 = vmatpush2.bf16.msra.mxu0 0
    %193 = vmatprep.subr.bf16.mxu0 0
    %194 = vmatpush2.bf16.msra.mxu0 0
    %195 = vmatprep.subr.bf16.mxu0 0
    %196 = vmatpush2.bf16.msra.mxu0 0
    %197 = vmatprep.subr.bf16.mxu0 0
    %198 = vmatpush2.bf16.msra.mxu0 0
    %199 = vmatprep.subr.bf16.mxu0 0
    %200 = vmatpush2.bf16.msra.mxu0 0
    %201 = vmatprep.mubr.bf16.mxu0 0
    %202 = vmatmul.mubr.bf16.gmra.mxu0 %v167
    %v203 = vpop.f32.mrf.mxu0
    %v204 = vadd.f32 %v90, %v203
    %v205 = vpop.f32.mrf.mxu0
    %v206 = vpop.f32.mrf.mxu0
    %v207 = vpop.f32.mrf.mxu0
    %208 = vdwg.mxu0
    %209 = vst [vmem:[#allocation7] sm:$0x3] %v204
    // Predicated region
    $region22: #{tpu_custom_call.1} parent=1 // pred_check
      _
    $region23: #{tpu_custom_call.1} parent=1 // pred_check_branch
      %211 = sbr.rel (0) target = $region25
    $region24: #{tpu_custom_call.1} parent=1 // pred_region
      %s213 = ssub.s32 32, 32
      %214 = vsyncadd [#allocation4], %s213
      %s216 = sshll.u32 [#allocation7], 4
      %s217 = int_to_ptr.vmem [resolvable:$true] %s216
      %219 = dma.vmem_to_hbm [thread:$0]  %s217, 32, %s3, [#allocation4]
    $region25: #{tpu_custom_call.1} parent=1 // pred_fallthru
      _
    // Predicated region
    $region26: #{tpu_custom_call.1} parent=1 // pred_check
      _
    $region27: #{tpu_custom_call.1} parent=1 // pred_check_branch
      %221 = sbr.rel (0) target = $region29
    $region28: #{tpu_custom_call.1} parent=1 // pred_region
      %222 = dma.done [#allocation4], 32
    $region29: #{tpu_custom_call.1} parent=1 // pred_fallthru
      _
    %223 = vsyncpa [#allocation3], 1
    %224 = vsyncpa [#allocation6], 1
    %225 = vsyncpa [#allocation4], 1

</llo_original>
